<compile_context>
chip_gen: v7x
topology: tpu7x:2x2x1
jax: 0.10.0
libtpu: 0.0.40
codegen_flags: <defaults>
</compile_context>

<pallas_src>
import jax
import jax.numpy as jnp
import numpy as np
from jax.experimental import pallas as pl
from jax.experimental.pallas import tpu as pltpu

# ---- model dims (small, consistent with the module's forward) -------------
B = 2        # batch
S = 8        # max_seq_len
H = 32       # bert hidden_size
M = 128      # mid_linear_dims (module default)
NTRIG = 2    # trigger_index is (bs, 2) -> cond dim = 2*H (matches Linear(2H, H))
EPS = 1e-12  # bert layer_norm_eps
LANES = 128

# ---- packed parameter slab layout (f32, width 128) -------------------------
R_WCOND = 0          # rows [0, 2H)  : [wdense | bdense | 0]   (cond @ this)
R_MIDW = 2 * H       # rows [2H, 3H) : mid_linear weight (H, M)
R_VEC = 3 * H        # rows [3H, 3H+8): one aligned (8,128) tile of small vecs
#   R_VEC + 0     : [clnw | clnb | 0]            (conditional-LN weight/bias)
#   R_VEC + 1     : mid_linear bias (M,)
#   R_VEC + 2..5  : [objw.T ; subw.T]  (4, M)    (fused classifier weight)
#   R_VEC + 6     : [objb | subb]      first 4 lanes (fused classifier bias)
SLAB_ROWS = 3 * H + 8   # 104 rows (multiple of 8), 128 lanes -> 52 KiB f32


def so_head_kernel(trig_ref, seq_ref, slab_ref, out_ref):
    """Whole-batch SOModel head in one invocation.

    trig_ref : SMEM (B, NTRIG) int32 (scalar prefetch)
    seq_ref  : VMEM (B, S, H) f32
    slab_ref : VMEM (SLAB_ROWS, 128) f32  (packed params)
    out_ref  : VMEM (B, S, 4) f32
    """
    x = seq_ref[...]                                         # (B, S, H)
    x2d = x.reshape(B * S, H)                                # (16, 32) layout no-op

    # --- trigger gather via one-hot MXU matmul (no dyn slices / lane concat) --
    row_ids = jax.lax.broadcasted_iota(jnp.int32, (2 * B, B * S), 0)
    col_ids = jax.lax.broadcasted_iota(jnp.int32, (2 * B, B * S), 1)
    sel = jnp.zeros((2 * B, B * S), jnp.float32)
    for t in range(NTRIG):                                   # NTRIG, B tiny & static
        for b in range(B):
            r = t * B + b
            idx = b * S + trig_ref[b, t]                     # scalar from SMEM
            sel = jnp.where((row_ids == r) & (col_ids == idx), 1.0, sel)
    gathered = jnp.dot(sel, x2d, preferred_element_type=jnp.float32)  # (2B, H)
    r0 = gathered[0:B, :]                                    # rows at trig[:,0]  (B, H)
    r1 = gathered[B:2 * B, :]                                # rows at trig[:,1]  (B, H)

    # --- packed parameters (static, aligned slices of the slab) -------------
    w_top = slab_ref[R_WCOND:R_WCOND + H, :]                 # (H,128) [wdense[:H] | bdense[:H]]
    w_bot = slab_ref[R_WCOND + H:R_WCOND + 2 * H, :]         # (H,128) [wdense[H:] | bdense[H:]]
    midw = slab_ref[R_MIDW:R_MIDW + H, :]                    # (H, M)
    vecs = slab_ref[R_VEC:R_VEC + 8, :]                      # (8, 128) packed vectors
    cln_wb = vecs[0:1, :]                                    # (1, 128)  [clnw|clnb|0]
    midb = vecs[1:2, :]                                      # (1, M)
    wcls_t = vecs[2:6, :]                                    # (4, M)   [objw.T ; subw.T]
    bcls = vecs[6:7, 0:4]                                    # (1, 4)   [objb | subb]

    # --- fused conditional-LN gamma/beta: split-weight accumulate ------------
    gb = (jnp.dot(r0, w_top, preferred_element_type=jnp.float32)
          + jnp.dot(r1, w_bot, preferred_element_type=jnp.float32)
          + cln_wb)                                          # (B, 128) = [gamma|beta|0]
    gamma = gb[:, :H][:, None, :]                            # (B, 1, H)
    beta = gb[:, H:2 * H][:, None, :]                        # (B, 1, H)

    # --- conditional LayerNorm (biased variance, rsqrt on the EUP slot) ------
    mean = jnp.mean(x, axis=-1, keepdims=True)
    xm = x - mean
    var = jnp.mean(xm * xm, axis=-1, keepdims=True)
    y = (xm * jax.lax.rsqrt(var + EPS)) * gamma + beta       # (B, S, H)

    # --- mid_linear + ReLU on flattened activation (dropout is eval no-op) ---
    y2d = y.reshape(B * S, H)                                # (16, 32)
    h = jnp.dot(y2d, midw, preferred_element_type=jnp.float32) + midb   # (BS, M)
    h = jnp.maximum(h, 0.0)

    # --- fused obj|sub classifier (NT matmul) + sigmoid, single store --------
    logits = jax.lax.dot_general(
        h, wcls_t, dimension_numbers=(((1,), (1,)), ((), ())),
        preferred_element_type=jnp.float32) + bcls           # (BS, 4) = [obj | sub]
    out_ref[...] = jax.nn.sigmoid(logits).reshape(B, S, 4)


def so_model_forward(seq_out, trigger_index, slab):
    """Single pallas_call: 1 SMEM scalar-prefetch input + 2 VMEM inputs."""
    # Clamp trigger indices (Pallas does not bounds-check VMEM; matches the
    # clamping semantics of jnp.take_along_axis in the reference).
    trig = jnp.clip(trigger_index.astype(jnp.int32), 0, S - 1)
    grid_spec = pltpu.PrefetchScalarGridSpec(
        num_scalar_prefetch=1,               # trigger_index -> SMEM
        grid=(1,),                           # whole problem in one invocation
        in_specs=[
            pl.BlockSpec((B, S, H), lambda i, trig: (0, 0, 0)),          # seq_out
            pl.BlockSpec((SLAB_ROWS, LANES), lambda i, trig: (0, 0)),    # param slab
        ],
        out_specs=pl.BlockSpec((B, S, 4), lambda i, trig: (0, 0, 0)),
    )
    return pl.pallas_call(
        so_head_kernel,
        out_shape=jax.ShapeDtypeStruct((B, S, 4), jnp.float32),
        grid_spec=grid_spec,
        compiler_params=pltpu.CompilerParams(
            dimension_semantics=("arbitrary",),
            vmem_limit_bytes=4 * 1024 * 1024,   # kernel touches ~120 KiB
        ),
    )(trig, seq_out, slab)


def pack_params(params):
    """Pack all head parameters into one lane-aligned (SLAB_ROWS, 128) slab."""
    (wdense, bdense, clnw, clnb, midw, midb, objw, objb, subw, subb) = map(
        np.asarray, params)
    slab = np.zeros((SLAB_ROWS, LANES), np.float32)
    slab[R_WCOND:R_WCOND + 2 * H, 0:H] = wdense            # gamma branch
    slab[R_WCOND:R_WCOND + 2 * H, H:2 * H] = bdense        # beta branch
    slab[R_MIDW:R_MIDW + H, 0:M] = midw
    slab[R_VEC + 0, 0:H] = clnw
    slab[R_VEC + 0, H:2 * H] = clnb
    slab[R_VEC + 1, 0:M] = midb
    slab[R_VEC + 2:R_VEC + 4, 0:M] = objw.T                # obj columns 0..1
    slab[R_VEC + 4:R_VEC + 6, 0:M] = subw.T                # sub columns 2..3
    slab[R_VEC + 6, 0:2] = objb
    slab[R_VEC + 6, 2:4] = subb
    return jnp.asarray(slab)


def reference_forward(seq_out, trigger_index, params):
    """Pure-JAX reference using the original (unfused) parameters."""
    (wdense, bdense, clnw, clnb, midw, midb, objw, objb, subw, subb) = params
    gathered = jnp.take_along_axis(
        seq_out, trigger_index[:, :, None].astype(jnp.int32), axis=1)   # (B, 2, H)
    cond = gathered.reshape(B, NTRIG * H)                               # (B, 2H)
    gamma = (cond @ wdense + clnw)[:, None, :]                          # (B, 1, H)
    beta = (cond @ bdense + clnb)[:, None, :]
    mean = jnp.mean(seq_out, axis=-1, keepdims=True)
    xm = seq_out - mean
    var = jnp.mean(xm * xm, axis=-1, keepdims=True)
    y = xm / jnp.sqrt(var + EPS) * gamma + beta
    h = jnp.maximum(y @ midw + midb, 0.0)
    obj = jax.nn.sigmoid(h @ objw + objb)
    sub = jax.nn.sigmoid(h @ subw + subb)
    return jnp.concatenate([obj, sub], axis=-1)


def init_params(key):
    """Deterministic synthetic params (shapes from SOModel.__init__).

    The real module zero-inits biases / ones-inits the cln weight; small random
    values are used here instead so the fused/packed bias & weight ordering is
    actually exercised by the correctness check.
    """
    ks = jax.random.split(key, 10)
    std = 0.02
    wdense = jax.random.normal(ks[0], (NTRIG * H, H), jnp.float32) * std
    bdense = jax.random.normal(ks[1], (NTRIG * H, H), jnp.float32) * std
    clnw = 1.0 + jax.random.normal(ks[2], (H,), jnp.float32) * std
    clnb = jax.random.normal(ks[3], (H,), jnp.float32) * std
    midw = jax.random.normal(ks[4], (H, M), jnp.float32) * std
    midb = jax.random.normal(ks[5], (M,), jnp.float32) * std
    objw = jax.random.normal(ks[6], (M, 2), jnp.float32) * std
    objb = jax.random.normal(ks[7], (2,), jnp.float32) * std
    subw = jax.random.normal(ks[8], (M, 2), jnp.float32) * std
    subb = jax.random.normal(ks[9], (2,), jnp.float32) * std
    return (wdense, bdense, clnw, clnb, midw, midb, objw, objb, subw, subb)


if __name__ == "__main__":
    key = jax.random.PRNGKey(0)
    k_seq, k_idx, k_par = jax.random.split(key, 3)

    # Synthetic BERT sequence output and trigger indices.
    seq_out = jax.random.normal(k_seq, (B, S, H), jnp.float32)
    trigger_index = jax.random.randint(k_idx, (B, NTRIG), 0, S, dtype=jnp.int32)
    params = init_params(k_par)
    slab = pack_params(params)

    logits = so_model_forward(seq_out, trigger_index, slab)
    jax.block_until_ready(logits)

    ref = reference_forward(seq_out, trigger_index, params)
    assert logits.shape == (B, S, 4)
    np.testing.assert_allclose(np.asarray(logits), np.asarray(ref),
                               rtol=1e-5, atol=1e-5)

    print("KERNEL_OK")
</pallas_src>

<mosaic_0001>
module attributes {stable_mosaic.version = 11 : i64} {
  func.func @so_head_kernel(%arg0: i32, %arg1: memref<2x2xi32, #tpu.memory_space<smem>>, %arg2: memref<2x8x32xf32, #tpu.memory_space<vmem>>, %arg3: memref<104x128xf32, #tpu.memory_space<vmem>>, %arg4: memref<2x8x4xf32, #tpu.memory_space<vmem>>) attributes {dimension_semantics = [#tpu.dimension_semantics<arbitrary>], iteration_bounds = array<i64: 1>, scalar_prefetch = 1 : i64, scratch_operands = 0 : i64, tpu.core_type = #tpu.core_type<tc>, window_params = [{pipeline_mode = #tpu.pipeline_mode<synchronous>, transform_indices = @transform_0, window_bounds = array<i64: 2, 8, 32>}, {pipeline_mode = #tpu.pipeline_mode<synchronous>, transform_indices = @transform_1, window_bounds = array<i64: 104, 128>}, {pipeline_mode = #tpu.pipeline_mode<synchronous>, transform_indices = @transform_2, window_bounds = array<i64: 2, 8, 4>}]} {
    %c0 = arith.constant 0 : index
    %c0_0 = arith.constant 0 : index
    %c0_1 = arith.constant 0 : index
    %0 = vector.load %arg2[%c0, %c0_0, %c0_1] : memref<2x8x32xf32, #tpu.memory_space<vmem>>, vector<2x8x32xf32>
    %1 = vector.shape_cast %0 : vector<2x8x32xf32> to vector<16x32xf32>
    %2 = tpu.iota {dimensions = array<i32: 0>} : vector<4x16xi32>
    %3 = tpu.iota {dimensions = array<i32: 1>} : vector<4x16xi32>
    %cst = arith.constant 0.000000e+00 : f32
    %4 = vector.broadcast %cst : f32 to vector<4x16xf32>
    %c0_2 = arith.constant 0 : index
    %c0_3 = arith.constant 0 : index
    %5 = memref.load %arg1[%c0_2, %c0_3] : memref<2x2xi32, #tpu.memory_space<smem>>
    %c0_i32 = arith.constant 0 : i32
    %6 = arith.addi %c0_i32, %5 : i32
    %c0_i32_4 = arith.constant 0 : i32
    %7 = vector.broadcast %c0_i32_4 : i32 to vector<4x16xi32>
    %8 = arith.cmpi eq, %2, %7 : vector<4x16xi32>
    %9 = vector.broadcast %6 : i32 to vector<4x16xi32>
    %10 = arith.cmpi eq, %3, %9 : vector<4x16xi32>
    %11 = arith.andi %8, %10 : vector<4x16xi1>
    %cst_5 = arith.constant 1.000000e+00 : f32
    %12 = vector.broadcast %cst_5 : f32 to vector<4x16xf32>
    %13 = arith.select %11, %12, %4 : vector<4x16xi1>, vector<4x16xf32>
    %c1 = arith.constant 1 : index
    %c0_6 = arith.constant 0 : index
    %14 = memref.load %arg1[%c1, %c0_6] : memref<2x2xi32, #tpu.memory_space<smem>>
    %c8_i32 = arith.constant 8 : i32
    %15 = arith.addi %c8_i32, %14 : i32
    %c1_i32 = arith.constant 1 : i32
    %16 = vector.broadcast %c1_i32 : i32 to vector<4x16xi32>
    %17 = arith.cmpi eq, %2, %16 : vector<4x16xi32>
    %18 = vector.broadcast %15 : i32 to vector<4x16xi32>
    %19 = arith.cmpi eq, %3, %18 : vector<4x16xi32>
    %20 = arith.andi %17, %19 : vector<4x16xi1>
    %cst_7 = arith.constant 1.000000e+00 : f32
    %21 = vector.broadcast %cst_7 : f32 to vector<4x16xf32>
    %22 = arith.select %20, %21, %13 : vector<4x16xi1>, vector<4x16xf32>
    %c0_8 = arith.constant 0 : index
    %c1_9 = arith.constant 1 : index
    %23 = memref.load %arg1[%c0_8, %c1_9] : memref<2x2xi32, #tpu.memory_space<smem>>
    %c0_i32_10 = arith.constant 0 : i32
    %24 = arith.addi %c0_i32_10, %23 : i32
    %c2_i32 = arith.constant 2 : i32
    %25 = vector.broadcast %c2_i32 : i32 to vector<4x16xi32>
    %26 = arith.cmpi eq, %2, %25 : vector<4x16xi32>
    %27 = vector.broadcast %24 : i32 to vector<4x16xi32>
    %28 = arith.cmpi eq, %3, %27 : vector<4x16xi32>
    %29 = arith.andi %26, %28 : vector<4x16xi1>
    %cst_11 = arith.constant 1.000000e+00 : f32
    %30 = vector.broadcast %cst_11 : f32 to vector<4x16xf32>
    %31 = arith.select %29, %30, %22 : vector<4x16xi1>, vector<4x16xf32>
    %c1_12 = arith.constant 1 : index
    %c1_13 = arith.constant 1 : index
    %32 = memref.load %arg1[%c1_12, %c1_13] : memref<2x2xi32, #tpu.memory_space<smem>>
    %c8_i32_14 = arith.constant 8 : i32
    %33 = arith.addi %c8_i32_14, %32 : i32
    %c3_i32 = arith.constant 3 : i32
    %34 = vector.broadcast %c3_i32 : i32 to vector<4x16xi32>
    %35 = arith.cmpi eq, %2, %34 : vector<4x16xi32>
    %36 = vector.broadcast %33 : i32 to vector<4x16xi32>
    %37 = arith.cmpi eq, %3, %36 : vector<4x16xi32>
    %38 = arith.andi %35, %37 : vector<4x16xi1>
    %cst_15 = arith.constant 1.000000e+00 : f32
    %39 = vector.broadcast %cst_15 : f32 to vector<4x16xf32>
    %40 = arith.select %38, %39, %31 : vector<4x16xi1>, vector<4x16xf32>
    %cst_16 = arith.constant dense<0.000000e+00> : vector<4x32xf32>
    %41 = tpu.matmul %40, %1, %cst_16 {dimension_numbers = #tpu.dot_dimension_numbers<[1], [0], [0], [1], [0, 0, 1, 1], [], []>} : vector<4x16xf32>, vector<16x32xf32>, vector<4x32xf32> -> vector<4x32xf32>
    %42 = vector.extract_strided_slice %41 {offsets = [0, 0], sizes = [2, 32], strides = [1, 1]} : vector<4x32xf32> to vector<2x32xf32>
    %43 = vector.extract_strided_slice %41 {offsets = [2, 0], sizes = [2, 32], strides = [1, 1]} : vector<4x32xf32> to vector<2x32xf32>
    %c0_17 = arith.constant 0 : index
    %c0_18 = arith.constant 0 : index
    %44 = vector.load %arg3[%c0_17, %c0_18] : memref<104x128xf32, #tpu.memory_space<vmem>>, vector<32x128xf32>
    %c32 = arith.constant 32 : index
    %c0_19 = arith.constant 0 : index
    %45 = vector.load %arg3[%c32, %c0_19] : memref<104x128xf32, #tpu.memory_space<vmem>>, vector<32x128xf32>
    %c64 = arith.constant 64 : index
    %c0_20 = arith.constant 0 : index
    %46 = vector.load %arg3[%c64, %c0_20] : memref<104x128xf32, #tpu.memory_space<vmem>>, vector<32x128xf32>
    %c96 = arith.constant 96 : index
    %c0_21 = arith.constant 0 : index
    %47 = vector.load %arg3[%c96, %c0_21] : memref<104x128xf32, #tpu.memory_space<vmem>>, vector<8x128xf32>
    %48 = vector.extract_strided_slice %47 {offsets = [0, 0], sizes = [1, 128], strides = [1, 1]} : vector<8x128xf32> to vector<1x128xf32>
    %49 = vector.extract_strided_slice %47 {offsets = [1, 0], sizes = [1, 128], strides = [1, 1]} : vector<8x128xf32> to vector<1x128xf32>
    %50 = vector.extract_strided_slice %47 {offsets = [2, 0], sizes = [4, 128], strides = [1, 1]} : vector<8x128xf32> to vector<4x128xf32>
    %51 = vector.extract_strided_slice %47 {offsets = [6, 0], sizes = [1, 4], strides = [1, 1]} : vector<8x128xf32> to vector<1x4xf32>
    %cst_22 = arith.constant dense<0.000000e+00> : vector<2x128xf32>
    %52 = tpu.matmul %42, %44, %cst_22 {dimension_numbers = #tpu.dot_dimension_numbers<[1], [0], [0], [1], [0, 0, 1, 1], [], []>} : vector<2x32xf32>, vector<32x128xf32>, vector<2x128xf32> -> vector<2x128xf32>
    %cst_23 = arith.constant dense<0.000000e+00> : vector<2x128xf32>
    %53 = tpu.matmul %43, %45, %cst_23 {dimension_numbers = #tpu.dot_dimension_numbers<[1], [0], [0], [1], [0, 0, 1, 1], [], []>} : vector<2x32xf32>, vector<32x128xf32>, vector<2x128xf32> -> vector<2x128xf32>
    %54 = arith.addf %52, %53 : vector<2x128xf32>
    %55 = vector.broadcast %48 : vector<1x128xf32> to vector<2x128xf32>
    %56 = arith.addf %54, %55 : vector<2x128xf32>
    %57 = vector.extract_strided_slice %56 {offsets = [0, 0], sizes = [2, 32], strides = [1, 1]} : vector<2x128xf32> to vector<2x32xf32>
    %58 = vector.shape_cast %57 : vector<2x32xf32> to vector<2x1x32xf32>
    %59 = vector.extract_strided_slice %56 {offsets = [0, 32], sizes = [2, 32], strides = [1, 1]} : vector<2x128xf32> to vector<2x32xf32>
    %60 = vector.shape_cast %59 : vector<2x32xf32> to vector<2x1x32xf32>
    %cst_24 = arith.constant dense<0.000000e+00> : vector<2x8xf32>
    %61 = vector.multi_reduction <add>, %0, %cst_24 [2] : vector<2x8x32xf32> to vector<2x8xf32>
    %62 = vector.shape_cast %61 : vector<2x8xf32> to vector<2x8x1xf32>
    %cst_25 = arith.constant 3.200000e+01 : f32
    %63 = vector.broadcast %cst_25 : f32 to vector<2x8x1xf32>
    %64 = arith.divf %62, %63 : vector<2x8x1xf32>
    %65 = vector.broadcast %64 : vector<2x8x1xf32> to vector<2x8x32xf32>
    %66 = arith.subf %0, %65 : vector<2x8x32xf32>
    %67 = arith.mulf %66, %66 : vector<2x8x32xf32>
    %cst_26 = arith.constant dense<0.000000e+00> : vector<2x8xf32>
    %68 = vector.multi_reduction <add>, %67, %cst_26 [2] : vector<2x8x32xf32> to vector<2x8xf32>
    %69 = vector.shape_cast %68 : vector<2x8xf32> to vector<2x8x1xf32>
    %cst_27 = arith.constant 3.200000e+01 : f32
    %70 = vector.broadcast %cst_27 : f32 to vector<2x8x1xf32>
    %71 = arith.divf %69, %70 : vector<2x8x1xf32>
    %cst_28 = arith.constant 9.99999996E-13 : f32
    %72 = vector.broadcast %cst_28 : f32 to vector<2x8x1xf32>
    %73 = arith.addf %71, %72 : vector<2x8x1xf32>
    %74 = math.rsqrt %73 : vector<2x8x1xf32>
    %75 = vector.broadcast %74 : vector<2x8x1xf32> to vector<2x8x32xf32>
    %76 = arith.mulf %66, %75 : vector<2x8x32xf32>
    %77 = vector.broadcast %58 : vector<2x1x32xf32> to vector<2x8x32xf32>
    %78 = arith.mulf %76, %77 : vector<2x8x32xf32>
    %79 = vector.broadcast %60 : vector<2x1x32xf32> to vector<2x8x32xf32>
    %80 = arith.addf %78, %79 : vector<2x8x32xf32>
    %81 = vector.shape_cast %80 : vector<2x8x32xf32> to vector<16x32xf32>
    %cst_29 = arith.constant dense<0.000000e+00> : vector<16x128xf32>
    %82 = tpu.matmul %81, %46, %cst_29 {dimension_numbers = #tpu.dot_dimension_numbers<[1], [0], [0], [1], [0, 0, 1, 1], [], []>} : vector<16x32xf32>, vector<32x128xf32>, vector<16x128xf32> -> vector<16x128xf32>
    %83 = vector.broadcast %49 : vector<1x128xf32> to vector<16x128xf32>
    %84 = arith.addf %82, %83 : vector<16x128xf32>
    %cst_30 = arith.constant 0.000000e+00 : f32
    %85 = vector.broadcast %cst_30 : f32 to vector<16x128xf32>
    %86 = arith.maximumf %84, %85 : vector<16x128xf32>
    %cst_31 = arith.constant dense<0.000000e+00> : vector<16x4xf32>
    %87 = tpu.matmul %86, %50, %cst_31 {dimension_numbers = #tpu.dot_dimension_numbers<[1], [1], [0], [0], [0, 0, 1, 0], [], []>} : vector<16x128xf32>, vector<4x128xf32>, vector<16x4xf32> -> vector<16x4xf32>
    %88 = vector.broadcast %51 : vector<1x4xf32> to vector<16x4xf32>
    %89 = arith.addf %87, %88 : vector<16x4xf32>
    %90 = arith.negf %89 : vector<16x4xf32>
    %91 = math.exp %90 : vector<16x4xf32>
    %cst_32 = arith.constant 1.000000e+00 : f32
    %92 = vector.broadcast %cst_32 : f32 to vector<16x4xf32>
    %93 = arith.addf %92, %91 : vector<16x4xf32>
    %94 = arith.divf %92, %93 : vector<16x4xf32>
    %95 = vector.shape_cast %94 : vector<16x4xf32> to vector<2x8x4xf32>
    %c0_33 = arith.constant 0 : index
    %c0_34 = arith.constant 0 : index
    %c0_35 = arith.constant 0 : index
    %96 = vector.load %arg4[%c0_33, %c0_34, %c0_35] : memref<2x8x4xf32, #tpu.memory_space<vmem>>, vector<2x8x4xf32>
    tpu.vector_store %arg4[%c0_33, %c0_34, %c0_35], %95 {strides = array<i32>} : memref<2x8x4xf32, #tpu.memory_space<vmem>>, vector<2x8x4xf32>,
    return
  }
  func.func @transform_0(%arg0: i32, %arg1: memref<2x2xi32, #tpu.memory_space<smem>>) -> (i32, i32, i32) {
    %c0_i32 = arith.constant 0 : i32
    %c0_i32_0 = arith.constant 0 : i32
    %c0_i32_1 = arith.constant 0 : i32
    %c0_i32_2 = arith.constant 0 : i32
    return %c0_i32, %c0_i32_0, %c0_i32_1 : i32, i32, i32
  }
  func.func @transform_1(%arg0: i32, %arg1: memref<2x2xi32, #tpu.memory_space<smem>>) -> (i32, i32) {
    %c0_i32 = arith.constant 0 : i32
    %c0_i32_0 = arith.constant 0 : i32
    %c0_i32_1 = arith.constant 0 : i32
    return %c0_i32, %c0_i32_0 : i32, i32
  }
  func.func @transform_2(%arg0: i32, %arg1: memref<2x2xi32, #tpu.memory_space<smem>>) -> (i32, i32, i32) {
    %c0_i32 = arith.constant 0 : i32
    %c0_i32_0 = arith.constant 0 : i32
    %c0_i32_1 = arith.constant 0 : i32
    %c0_i32_2 = arith.constant 0 : i32
    return %c0_i32, %c0_i32_0, %c0_i32_1 : i32, i32, i32
  }
}

</mosaic_0001>

<llo_original>
// kernel: tpu_custom_call.1
$region0: #{tpu_custom_call.1}
  #allocation0 [shape = 'u32[]', space=smem, size = 0x4, offset = 0x4, fixed_abs, tag = 'smem constant byte address 0x4 - core index']
  #allocation1 [shape = 'u32[144,128]{1,0:T(1,128)}', space=vmem, size = 0x12000, scoped, tag = 'internal scratch']
  #allocation2 [shape = 's32[1]{0}', space=sflag, size = 0x4, scoped, tag = 'scoped memory for tpu_custom_call.1']
  #allocation3 [shape = 'u8[1024]{0}', space=smem, size = 0x400, scoped, tag = 'prefetched SMEM operand 0']
  %s0 = inlined_call_operand.hbm [shape: s32[2,2], index: 0, kind: input, shape index: {}]
  %s1 = inlined_call_operand.hbm [shape: f32[2,8,32], index: 1, kind: input, shape index: {}]
  %s2 = inlined_call_operand.hbm [shape: f32[104,128], index: 2, kind: input, shape index: {}]
  %s3 = inlined_call_operand.vmem [shape: f32[2,8,4], index: 3, kind: output, shape index: {}]
  %s4 = sld [smem:[#allocation0]]
  $region26: #{tpu_custom_call.1} parent=0
    _
  %s6 = ssub.s32 1, %s4
  %s7 = scalar_select 0, %s6, %s4
  %9 = dma.hbm_to_smem %s0, 32, [#allocation3], [#allocation2]
  %10 = dma.done [#allocation2], 32
  %11 = sfence
  $region1: #{tpu_custom_call.1} parent=0
    #allocation4 [shape = 'u8[8192]{0}', space=vmem, size = 0x2000, scoped, tag = 'input window, operand 1, single buffered']
    #allocation5 [shape = 's32[1]{0}', space=sflag, size = 0x4, scoped, tag = 'scoped memory for tpu_custom_call.1']
    #allocation6 [shape = 'u8[53248]{0}', space=vmem, size = 0xd000, scoped, tag = 'input window, operand 2, single buffered']
    #allocation7 [shape = 's32[1]{0}', space=sflag, size = 0x4, scoped, tag = 'scoped memory for tpu_custom_call.1']
    %12 = vsyncpa [#allocation5], 0
    %13 = vsyncpa [#allocation7], 0
    // Predicated region
    $region2: #{tpu_custom_call.1} parent=1 // pred_check
      _
    $region3: #{tpu_custom_call.1} parent=1 // pred_check_branch
      %15 = sbr.rel (0) target = $region5
    $region4: #{tpu_custom_call.1} parent=1 // pred_region
      %s17 = ssub.s32 256, 256
      %18 = vsyncadd [#allocation5], %s17
      %s19 = sshll.u32 [#allocation4], 4
      %s20 = int_to_ptr.vmem [resolvable:$true] %s19
      %25 = dma.hbm_to_vmem [thread:$0]  %s1, 256, %s20, [#allocation5], 128, 128, 8
    $region5: #{tpu_custom_call.1} parent=1 // pred_fallthru
      _
    // Predicated region
    $region6: #{tpu_custom_call.1} parent=1 // pred_check
      _
    $region7: #{tpu_custom_call.1} parent=1 // pred_check_branch
      %27 = sbr.rel (0) target = $region9
    $region8: #{tpu_custom_call.1} parent=1 // pred_region
      %s29 = ssub.s32 1664, 1664
      %30 = vsyncadd [#allocation7], %s29
      %s31 = sshll.u32 [#allocation6], 4
      %s32 = int_to_ptr.vmem [resolvable:$true] %s31
      %37 = dma.hbm_to_vmem [thread:$0]  %s2, 1664, %s32, [#allocation7], 128, 128, 8
    $region9: #{tpu_custom_call.1} parent=1 // pred_fallthru
      _
    // Predicated region
    $region10: #{tpu_custom_call.1} parent=1 // pred_check
      _
    $region11: #{tpu_custom_call.1} parent=1 // pred_check_branch
      %39 = sbr.rel (0) target = $region13
    $region12: #{tpu_custom_call.1} parent=1 // pred_region
      %40 = dma.done [#allocation5], 256
    $region13: #{tpu_custom_call.1} parent=1 // pred_fallthru
      _
    // Predicated region
    $region14: #{tpu_custom_call.1} parent=1 // pred_check
      _
    $region15: #{tpu_custom_call.1} parent=1 // pred_check_branch
      %42 = sbr.rel (0) target = $region17
    $region16: #{tpu_custom_call.1} parent=1 // pred_region
      %43 = dma.done [#allocation7], 1664
    $region17: #{tpu_custom_call.1} parent=1 // pred_fallthru
      _
    %v44 = vld [vmem:[#allocation4] sm:$0xff]
    %v45 = vld [vmem:[#allocation4 + $0x8] sm:$0xff]
    %v46 = vlaneseq
    %v47 = vshrl.u32 %v46, 7
    %v48 = vlaneseq
    %v49 = vand.u32 %v48, 127
    %s50 = sld [smem:[#allocation3]]
    %vm51 = vcmp.eq.s32.totalorder %v47, 0
    %v52 = vstv %s50
    %vm53 = vcmp.eq.s32.totalorder %v49, %v52
    %vm54 = vmand %vm51, %vm53
    %v55 = vsel %vm54, 1.0, 0.0
    %s56 = sld [smem:[#allocation3 + $0x80]]
    %s57 = sadd.s32 %s56, 8
    %vm58 = vcmp.eq.s32.totalorder %v47, 1
    %v59 = vstv %s57
    %vm60 = vcmp.eq.s32.totalorder %v49, %v59
    %vm61 = vmand %vm58, %vm60
    %v62 = vsel %vm61, 1.0, %v55
    %s63 = sld [smem:[#allocation3 + $0x1]]
    %vm64 = vcmp.eq.s32.totalorder %v47, 2
    %v65 = vstv %s63
    %vm66 = vcmp.eq.s32.totalorder %v49, %v65
    %vm67 = vmand %vm64, %vm66
    %v68 = vsel %vm67, 1.0, %v62
    %s69 = sld [smem:[#allocation3 + $0x81]]
    %s70 = sadd.s32 %s69, 8
    %vm71 = vcmp.eq.s32.totalorder %v47, 3
    %v72 = vstv %s70
    %vm73 = vcmp.eq.s32.totalorder %v49, %v72
    %vm74 = vmand %vm71, %vm73
    %v75 = vsel %vm74, 1.0, %v68
    %vm76 = vcmask 130048
    %v78 = vsel %vm76, %v75, 0
    %80 = vmatprep.subr.mxu0 0.0
    %81 = vmatpush1.msra.mxu0 %v44
    %82 = vmatprep.subr.mxu0 0.0
    %83 = vmatpush1.msra.mxu0 %v45
    %84 = vmatprep.subr.mxu0 0.0
    %85 = vmatpush1.msra.mxu0 0.0
    %86 = vmatprep.subr.mxu0 0.0
    %87 = vmatpush1.msra.mxu0 0.0
    %88 = vmatprep.subr.mxu0 0.0
    %89 = vmatpush1.msra.mxu0 0.0
    %90 = vmatprep.subr.mxu0 0.0
    %91 = vmatpush1.msra.mxu0 0.0
    %92 = vmatprep.subr.mxu0 0.0
    %93 = vmatpush1.msra.mxu0 0.0
    %94 = vmatprep.subr.mxu0 0.0
    %95 = vmatpush1.msra.mxu0 0.0
    %96 = vmatprep.subr.mxu0 0.0
    %97 = vmatpush1.msra.mxu0 0.0
    %98 = vmatprep.subr.mxu0 0.0
    %99 = vmatpush1.msra.mxu0 0.0
    %100 = vmatprep.subr.mxu0 0.0
    %101 = vmatpush1.msra.mxu0 0.0
    %102 = vmatprep.subr.mxu0 0.0
    %103 = vmatpush1.msra.mxu0 0.0
    %104 = vmatprep.subr.mxu0 0.0
    %105 = vmatpush1.msra.mxu0 0.0
    %106 = vmatprep.subr.mxu0 0.0
    %107 = vmatpush1.msra.mxu0 0.0
    %108 = vmatprep.subr.mxu0 0.0
    %109 = vmatpush1.msra.mxu0 0.0
    %110 = vmatprep.subr.mxu0 0.0
    %111 = vmatpush1.msra.mxu0 0.0
    %112 = vmatprep.subr.mxu0 0.0
    %113 = vmatpush1.msra.mxu0 0.0
    %114 = vmatprep.subr.mxu0 0.0
    %115 = vmatpush1.msra.mxu0 0.0
    %116 = vmatprep.subr.mxu0 0.0
    %117 = vmatpush1.msra.mxu0 0.0
    %118 = vmatprep.subr.mxu0 0.0
    %119 = vmatpush1.msra.mxu0 0.0
    %120 = vmatprep.subr.mxu0 0.0
    %121 = vmatpush1.msra.mxu0 0.0
    %122 = vmatprep.subr.mxu0 0.0
    %123 = vmatpush1.msra.mxu0 0.0
    %124 = vmatprep.subr.mxu0 0.0
    %125 = vmatpush1.msra.mxu0 0.0
    %126 = vmatprep.subr.mxu0 0.0
    %127 = vmatpush1.msra.mxu0 0.0
    %128 = vmatprep.subr.mxu0 0.0
    %129 = vmatpush1.msra.mxu0 0.0
    %130 = vmatprep.subr.mxu0 0.0
    %131 = vmatpush1.msra.mxu0 0.0
    %132 = vmatprep.subr.mxu0 0.0
    %133 = vmatpush1.msra.mxu0 0.0
    %134 = vmatprep.subr.mxu0 0.0
    %135 = vmatpush1.msra.mxu0 0.0
    %136 = vmatprep.subr.mxu0 0.0
    %137 = vmatpush1.msra.mxu0 0.0
    %138 = vmatprep.subr.mxu0 0.0
    %139 = vmatpush1.msra.mxu0 0.0
    %140 = vmatprep.subr.mxu0 0.0
    %141 = vmatpush1.msra.mxu0 0.0
    %142 = vmatprep.subr.mxu0 0.0
    %143 = vmatpush1.msra.mxu0 0.0
    %144 = vmatprep.mubr.f32.mxu0 0.0
    %145 = vmatmul.mubr.f32.gmra.mrb[0].mxu0 %v78
    %v146 = vpop.f32.mrb[0].mxu0
    %v147 = vadd.f32 0.0, %v146
    %v148 = vpop.f32.mrb[0].mxu0
    %149 = vdwg.mxu0
    %v150 = vld [vmem:[#allocation6] sm:$0xff]
    %v151 = vld [vmem:[#allocation6 + $0x8] sm:$0xff]
    %v152 = vld [vmem:[#allocation6 + $0x10] sm:$0xff]
    %v153 = vld [vmem:[#allocation6 + $0x18] sm:$0xff]
    %v154 = vld [vmem:[#allocation6 + $0x20] sm:$0xff]
    %v155 = vld [vmem:[#allocation6 + $0x28] sm:$0xff]
    %v156 = vld [vmem:[#allocation6 + $0x30] sm:$0xff]
    %v157 = vld [vmem:[#allocation6 + $0x38] sm:$0xff]
    %v158 = vld [vmem:[#allocation6 + $0x40] sm:$0xff]
    %v159 = vld [vmem:[#allocation6 + $0x48] sm:$0xff]
    %v160 = vld [vmem:[#allocation6 + $0x50] sm:$0xff]
    %v161 = vld [vmem:[#allocation6 + $0x58] sm:$0xff]
    %v162 = vld [vmem:[#allocation6 + $0x60] sm:$0xff]
    %v164 = vrot.slane %v147, 2
    %vm165 = vcmask 261120
    %v166 = vsel %vm165, %v164, 0
    %168 = vmatprep.subr.mxu0 0.0
    %169 = vmatpush1.msra.mxu0 %v154
    %170 = vmatprep.subr.mxu0 0.0
    %171 = vmatpush1.msra.mxu0 %v155
    %172 = vmatprep.subr.mxu0 0.0
    %173 = vmatpush1.msra.mxu0 %v156
    %174 = vmatprep.subr.mxu0 0.0
    %175 = vmatpush1.msra.mxu0 %v157
    %176 = vmatprep.subr.mxu0 0.0
    %177 = vmatpush1.msra.mxu0 0.0
    %178 = vmatprep.subr.mxu0 0.0
    %179 = vmatpush1.msra.mxu0 0.0
    %180 = vmatprep.subr.mxu0 0.0
    %181 = vmatpush1.msra.mxu0 0.0
    %182 = vmatprep.subr.mxu0 0.0
    %183 = vmatpush1.msra.mxu0 0.0
    %184 = vmatprep.subr.mxu0 0.0
    %185 = vmatpush1.msra.mxu0 0.0
    %186 = vmatprep.subr.mxu0 0.0
    %187 = vmatpush1.msra.mxu0 0.0
    %188 = vmatprep.subr.mxu0 0.0
    %189 = vmatpush1.msra.mxu0 0.0
    %190 = vmatprep.subr.mxu0 0.0
    %191 = vmatpush1.msra.mxu0 0.0
    %192 = vmatprep.subr.mxu0 0.0
    %193 = vmatpush1.msra.mxu0 0.0
    %194 = vmatprep.subr.mxu0 0.0
    %195 = vmatpush1.msra.mxu0 0.0
    %196 = vmatprep.subr.mxu0 0.0
    %197 = vmatpush1.msra.mxu0 0.0
    %198 = vmatprep.subr.mxu0 0.0
    %199 = vmatpush1.msra.mxu0 0.0
    %200 = vmatprep.subr.mxu0 0.0
    %201 = vmatpush1.msra.mxu0 0.0
    %202 = vmatprep.subr.mxu0 0.0
    %203 = vmatpush1.msra.mxu0 0.0
    %204 = vmatprep.subr.mxu0 0.0
    %205 = vmatpush1.msra.mxu0 0.0
    %206 = vmatprep.subr.mxu0 0.0
    %207 = vmatpush1.msra.mxu0 0.0
    %208 = vmatprep.subr.mxu0 0.0
    %209 = vmatpush1.msra.mxu0 0.0
    %210 = vmatprep.subr.mxu0 0.0
    %211 = vmatpush1.msra.mxu0 0.0
    %212 = vmatprep.subr.mxu0 0.0
    %213 = vmatpush1.msra.mxu0 0.0
    %214 = vmatprep.subr.mxu0 0.0
    %215 = vmatpush1.msra.mxu0 0.0
    %216 = vmatprep.subr.mxu0 0.0
    %217 = vmatpush1.msra.mxu0 0.0
    %218 = vmatprep.subr.mxu0 0.0
    %219 = vmatpush1.msra.mxu0 0.0
    %220 = vmatprep.subr.mxu0 0.0
    %221 = vmatpush1.msra.mxu0 0.0
    %222 = vmatprep.subr.mxu0 0.0
    %223 = vmatpush1.msra.mxu0 0.0
    %224 = vmatprep.subr.mxu0 0.0
    %225 = vmatpush1.msra.mxu0 0.0
    %226 = vmatprep.subr.mxu0 0.0
    %227 = vmatpush1.msra.mxu0 0.0
    %228 = vmatprep.subr.mxu0 0.0
    %229 = vmatpush1.msra.mxu0 0.0
    %230 = vmatprep.subr.mxu0 0.0
    %231 = vmatpush1.msra.mxu0 0.0
    %232 = vmatprep.mubr.f32.mxu0 0.0
    %233 = vmatmul.mubr.f32.gmra.mrb[0].mxu0 %v166
    %v234 = vpop.f32.mrb[0].mxu0
    %v235 = vadd.f32 0.0, %v234
    %v236 = vpop.f32.mrb[0].mxu0
    %237 = vdwg.mxu0
    %v238 = vsel %vm165, %v147, 0
    %240 = vmatprep.subr.mxu0 0.0
    %241 = vmatpush1.msra.mxu0 %v150
    %242 = vmatprep.subr.mxu0 0.0
    %243 = vmatpush1.msra.mxu0 %v151
    %244 = vmatprep.subr.mxu0 0.0
    %245 = vmatpush1.msra.mxu0 %v152
    %246 = vmatprep.subr.mxu0 0.0
    %247 = vmatpush1.msra.mxu0 %v153
    %248 = vmatprep.subr.mxu0 0.0
    %249 = vmatpush1.msra.mxu0 0.0
    %250 = vmatprep.subr.mxu0 0.0
    %251 = vmatpush1.msra.mxu0 0.0
    %252 = vmatprep.subr.mxu0 0.0
    %253 = vmatpush1.msra.mxu0 0.0
    %254 = vmatprep.subr.mxu0 0.0
    %255 = vmatpush1.msra.mxu0 0.0
    %256 = vmatprep.subr.mxu0 0.0
    %257 = vmatpush1.msra.mxu0 0.0
    %258 = vmatprep.subr.mxu0 0.0
    %259 = vmatpush1.msra.mxu0 0.0
    %260 = vmatprep.subr.mxu0 0.0
    %261 = vmatpush1.msra.mxu0 0.0
    %262 = vmatprep.subr.mxu0 0.0
    %263 = vmatpush1.msra.mxu0 0.0
    %264 = vmatprep.subr.mxu0 0.0
    %265 = vmatpush1.msra.mxu0 0.0
    %266 = vmatprep.subr.mxu0 0.0
    %267 = vmatpush1.msra.mxu0 0.0
    %268 = vmatprep.subr.mxu0 0.0
    %269 = vmatpush1.msra.mxu0 0.0
    %270 = vmatprep.subr.mxu0 0.0
    %271 = vmatpush1.msra.mxu0 0.0
    %272 = vmatprep.subr.mxu0 0.0
    %273 = vmatpush1.msra.mxu0 0.0
    %274 = vmatprep.subr.mxu0 0.0
    %275 = vmatpush1.msra.mxu0 0.0
    %276 = vmatprep.subr.mxu0 0.0
    %277 = vmatpush1.msra.mxu0 0.0
    %278 = vmatprep.subr.mxu0 0.0
    %279 = vmatpush1.msra.mxu0 0.0
    %280 = vmatprep.subr.mxu0 0.0
    %281 = vmatpush1.msra.mxu0 0.0
    %282 = vmatprep.subr.mxu0 0.0
    %283 = vmatpush1.msra.mxu0 0.0
    %284 = vmatprep.subr.mxu0 0.0
    %285 = vmatpush1.msra.mxu0 0.0
    %286 = vmatprep.subr.mxu0 0.0
    %287 = vmatpush1.msra.mxu0 0.0
    %288 = vmatprep.subr.mxu0 0.0
    %289 = vmatpush1.msra.mxu0 0.0
    %290 = vmatprep.subr.mxu0 0.0
    %291 = vmatpush1.msra.mxu0 0.0
    %292 = vmatprep.subr.mxu0 0.0
    %293 = vmatpush1.msra.mxu0 0.0
    %294 = vmatprep.subr.mxu0 0.0
    %295 = vmatpush1.msra.mxu0 0.0
    %296 = vmatprep.subr.mxu0 0.0
    %297 = vmatpush1.msra.mxu0 0.0
    %298 = vmatprep.subr.mxu0 0.0
    %299 = vmatpush1.msra.mxu0 0.0
    %300 = vmatprep.subr.mxu0 0.0
    %301 = vmatpush1.msra.mxu0 0.0
    %302 = vmatprep.subr.mxu0 0.0
    %303 = vmatpush1.msra.mxu0 0.0
    %304 = vmatprep.mubr.f32.mxu0 0.0
    %305 = vmatmul.mubr.f32.gmra.mrb[0].mxu0 %v238
    %v306 = vpop.f32.mrb[0].mxu0
    %v307 = vadd.f32 %v235, %v306
    %v308 = vpop.f32.mrb[0].mxu0
    %309 = vdwg.mxu0
    %v310 = vlaneseq
    %v311 = vshrl.u32 %v310, 7
    %v312 = vsub.s32 0, %v311
    %v313 = vrot.slane %v162, %v312
    %v314 = vadd.f32 %v307, %v313
    %v317 = vunpack.c.l.s4 1966171168
    %v318 = vunpack.c.0.s8 %v317
    %v319 = vlaneseq
    %v320 = vshrl.u32 %v319, 7
    %v321 = vsub.s32 %v318, %v320
    %v322 = vrot.slane %v314, %v321
    %v323 = vcombine.high %v322, %v322
    %v325 = vunpack.c.l.s4 1966171168
    %v326 = vunpack.c.0.s8 %v325
    %v327 = vlaneseq
    %v328 = vshrl.u32 %v327, 7
    %v329 = vsub.s32 %v326, %v328
    %v330 = vrot.slane %v322, %v329
    %v332 = vunpack.c.l.s4 1966171168
    %v333 = vunpack.c.0.s8 %v332
    %v334 = vlaneseq
    %v335 = vshrl.u32 %v334, 7
    %v336 = vsub.s32 %v333, %v335
    %v337 = vrot.slane %v323, %v336
    %v338 = vsel %vm165, %v44, 0.0
    %339 = vadd.xlane.f32.xlu0 %v338
    %v340 = vpop.xlane.xlu0 %339
    %v341 = vsel %vm165, %v45, 0.0
    %342 = vadd.xlane.f32.xlu0 %v341
    %v343 = vpop.xlane.xlu0 %342
    %v344 = vrcp.pop 32.0
    %v345 = vmul.f32 %v340, %v344
    %v346 = vmul.f32 %v343, %v344
    %v347 = vsub.f32 %v44, %v345
    %v348 = vsub.f32 %v45, %v346
    %v349 = vmul.f32 %v347, %v347
    %v350 = vmul.f32 %v348, %v348
    %v351 = vsel %vm165, %v349, 0.0
    %352 = vadd.xlane.f32.xlu0 %v351
    %v353 = vpop.xlane.xlu0 %352
    %v354 = vsel %vm165, %v350, 0.0
    %355 = vadd.xlane.f32.xlu0 %v354
    %v356 = vpop.xlane.xlu0 %355
    %v357 = vmul.f32 %v353, %v344
    %v358 = vmul.f32 %v356, %v344
    %v359 = vadd.f32 %v357, 1e-12
    %v360 = vadd.f32 %v358, 1e-12
    %v361 = vrsqrt.pop %v359
    %v362 = vrsqrt.pop %v360
    %v363 = vmul.f32 %v347, %v361
    %v364 = vmul.f32 %v348, %v362
    %v365 = vlaneseq
    %v366 = vshrl.u32 %v365, 7
    %v367 = vsub.s32 0, %v366
    %v368 = vrot.slane %v330, %v367
    %v369 = vlaneseq
    %v370 = vshrl.u32 %v369, 7
    %v371 = vsub.s32 0, %v370
    %v372 = vrot.slane %v337, %v371
    %v375 = vmul.f32 %v363, %v368
    %v376 = vmul.f32 %v364, %v372
    %377 = vrot.lane.b32.xlu0 %v368, 96
    %v378 = vpop.permute.xlu0 %377
    %379 = vrot.lane.b32.xlu0 %v372, 96
    %v380 = vpop.permute.xlu0 %379
    %v383 = vadd.f32 %v375, %v378
    %v384 = vadd.f32 %v376, %v380
    %v385 = vlaneseq
    %v386 = vshrl.u32 %v385, 7
    %v387 = vsub.s32 1, %v386
    %v388 = vrot.slane %v162, %v387
    %v390 = vsel %vm165, %v383, 0
    %v393 = vsel %vm165, %v384, 0
    %395 = vmatprep.subr.mxu0 0.0
    %396 = vmatpush1.msra.mxu0 %v158
    %397 = vmatprep.subr.mxu0 0.0
    %398 = vmatpush1.msra.mxu0 %v159
    %399 = vmatprep.subr.mxu0 0.0
    %400 = vmatpush1.msra.mxu0 %v160
    %401 = vmatprep.subr.mxu0 0.0
    %402 = vmatpush1.msra.mxu0 %v161
    %403 = vmatprep.subr.mxu0 0.0
    %404 = vmatpush1.msra.mxu0 0.0
    %405 = vmatprep.subr.mxu0 0.0
    %406 = vmatpush1.msra.mxu0 0.0
    %407 = vmatprep.subr.mxu0 0.0
    %408 = vmatpush1.msra.mxu0 0.0
    %409 = vmatprep.subr.mxu0 0.0
    %410 = vmatpush1.msra.mxu0 0.0
    %411 = vmatprep.subr.mxu0 0.0
    %412 = vmatpush1.msra.mxu0 0.0
    %413 = vmatprep.subr.mxu0 0.0
    %414 = vmatpush1.msra.mxu0 0.0
    %415 = vmatprep.subr.mxu0 0.0
    %416 = vmatpush1.msra.mxu0 0.0
    %417 = vmatprep.subr.mxu0 0.0
    %418 = vmatpush1.msra.mxu0 0.0
    %419 = vmatprep.subr.mxu0 0.0
    %420 = vmatpush1.msra.mxu0 0.0
    %421 = vmatprep.subr.mxu0 0.0
    %422 = vmatpush1.msra.mxu0 0.0
    %423 = vmatprep.subr.mxu0 0.0
    %424 = vmatpush1.msra.mxu0 0.0
    %425 = vmatprep.subr.mxu0 0.0
    %426 = vmatpush1.msra.mxu0 0.0
    %427 = vmatprep.subr.mxu0 0.0
    %428 = vmatpush1.msra.mxu0 0.0
    %429 = vmatprep.subr.mxu0 0.0
    %430 = vmatpush1.msra.mxu0 0.0
    %431 = vmatprep.subr.mxu0 0.0
    %432 = vmatpush1.msra.mxu0 0.0
    %433 = vmatprep.subr.mxu0 0.0
    %434 = vmatpush1.msra.mxu0 0.0
    %435 = vmatprep.subr.mxu0 0.0
    %436 = vmatpush1.msra.mxu0 0.0
    %437 = vmatprep.subr.mxu0 0.0
    %438 = vmatpush1.msra.mxu0 0.0
    %439 = vmatprep.subr.mxu0 0.0
    %440 = vmatpush1.msra.mxu0 0.0
    %441 = vmatprep.subr.mxu0 0.0
    %442 = vmatpush1.msra.mxu0 0.0
    %443 = vmatprep.subr.mxu0 0.0
    %444 = vmatpush1.msra.mxu0 0.0
    %445 = vmatprep.subr.mxu0 0.0
    %446 = vmatpush1.msra.mxu0 0.0
    %447 = vmatprep.subr.mxu0 0.0
    %448 = vmatpush1.msra.mxu0 0.0
    %449 = vmatprep.subr.mxu0 0.0
    %450 = vmatpush1.msra.mxu0 0.0
    %451 = vmatprep.subr.mxu0 0.0
    %452 = vmatpush1.msra.mxu0 0.0
    %453 = vmatprep.subr.mxu0 0.0
    %454 = vmatpush1.msra.mxu0 0.0
    %455 = vmatprep.subr.mxu0 0.0
    %456 = vmatpush1.msra.mxu0 0.0
    %457 = vmatprep.subr.mxu0 0.0
    %458 = vmatpush1.msra.mxu0 0.0
    %459 = vmatprep.mubr.f32.mxu0 0.0
    %460 = vmatmul.mubr.f32.gmra.mrb[0].mxu0 %v390
    %v461 = vpop.f32.mrb[0].mxu0
    %v462 = vadd.f32 %v388, %v461
    %v463 = vpop.f32.mrb[0].mxu0
    %464 = vmatprep.mubr.f32.mxu0 0.0
    %465 = vmatmul.mubr.f32.gmra.mrb[0].mxu0 %v393
    %v466 = vpop.f32.mrb[0].mxu0
    %v467 = vadd.f32 %v388, %v466
    %v468 = vpop.f32.mrb[0].mxu0
    %469 = vdwg.mxu0
    %v470 = vmax.f32 %v462, 0.0
    %v471 = vmax.f32 %v467, 0.0
    %v472 = vlaneseq
    %v473 = vshrl.u32 %v472, 7
    %v474 = vsub.s32 6, %v473
    %v475 = vrot.slane %v162, %v474
    %v477 = vrot.slane %v162, 2
    %479 = vmatprep.subr.mxu0 0.0
    %480 = vmatpush1.xpose.msra.mxu0 %v477
    %481 = vmatprep.subr.mxu0 0.0
    %482 = vmatpush1.xpose.msra.mxu0 0.0
    %483 = vmatprep.subr.mxu0 0.0
    %484 = vmatpush1.xpose.msra.mxu0 0.0
    %485 = vmatprep.subr.mxu0 0.0
    %486 = vmatpush1.xpose.msra.mxu0 0.0
    %487 = vmatprep.subr.mxu0 0.0
    %488 = vmatpush1.xpose.msra.mxu0 0.0
    %489 = vmatprep.subr.mxu0 0.0
    %490 = vmatpush1.xpose.msra.mxu0 0.0
    %491 = vmatprep.subr.mxu0 0.0
    %492 = vmatpush1.xpose.msra.mxu0 0.0
    %493 = vmatprep.subr.mxu0 0.0
    %494 = vmatpush1.xpose.msra.mxu0 0.0
    %495 = vmatprep.subr.mxu0 0.0
    %496 = vmatpush1.xpose.msra.mxu0 0.0
    %497 = vmatprep.subr.mxu0 0.0
    %498 = vmatpush1.xpose.msra.mxu0 0.0
    %499 = vmatprep.subr.mxu0 0.0
    %500 = vmatpush1.xpose.msra.mxu0 0.0
    %501 = vmatprep.subr.mxu0 0.0
    %502 = vmatpush1.xpose.msra.mxu0 0.0
    %503 = vmatprep.subr.mxu0 0.0
    %504 = vmatpush1.xpose.msra.mxu0 0.0
    %505 = vmatprep.subr.mxu0 0.0
    %506 = vmatpush1.xpose.msra.mxu0 0.0
    %507 = vmatprep.subr.mxu0 0.0
    %508 = vmatpush1.xpose.msra.mxu0 0.0
    %509 = vmatprep.subr.mxu0 0.0
    %510 = vmatpush1.xpose.msra.mxu0 0.0
    %511 = vmatprep.subr.mxu0 0.0
    %512 = vmatpush1.xpose.msra.mxu0 0.0
    %513 = vmatprep.subr.mxu0 0.0
    %514 = vmatpush1.xpose.msra.mxu0 0.0
    %515 = vmatprep.subr.mxu0 0.0
    %516 = vmatpush1.xpose.msra.mxu0 0.0
    %517 = vmatprep.subr.mxu0 0.0
    %518 = vmatpush1.xpose.msra.mxu0 0.0
    %519 = vmatprep.subr.mxu0 0.0
    %520 = vmatpush1.xpose.msra.mxu0 0.0
    %521 = vmatprep.subr.mxu0 0.0
    %522 = vmatpush1.xpose.msra.mxu0 0.0
    %523 = vmatprep.subr.mxu0 0.0
    %524 = vmatpush1.xpose.msra.mxu0 0.0
    %525 = vmatprep.subr.mxu0 0.0
    %526 = vmatpush1.xpose.msra.mxu0 0.0
    %527 = vmatprep.subr.mxu0 0.0
    %528 = vmatpush1.xpose.msra.mxu0 0.0
    %529 = vmatprep.subr.mxu0 0.0
    %530 = vmatpush1.xpose.msra.mxu0 0.0
    %531 = vmatprep.subr.mxu0 0.0
    %532 = vmatpush1.xpose.msra.mxu0 0.0
    %533 = vmatprep.subr.mxu0 0.0
    %534 = vmatpush1.xpose.msra.mxu0 0.0
    %535 = vmatprep.subr.mxu0 0.0
    %536 = vmatpush1.xpose.msra.mxu0 0.0
    %537 = vmatprep.subr.mxu0 0.0
    %538 = vmatpush1.xpose.msra.mxu0 0.0
    %539 = vmatprep.subr.mxu0 0.0
    %540 = vmatpush1.xpose.msra.mxu0 0.0
    %541 = vmatprep.subr.mxu0 0.0
    %542 = vmatpush1.xpose.msra.mxu0 0.0
    %543 = vmatprep.mubr.f32.mxu0 0.0
    %544 = vmatmul.mubr.f32.gmra.mrb[0].mxu0 %v470
    %v545 = vpop.f32.mrb[0].mxu0
    %v546 = vadd.f32 %v475, %v545
    %v547 = vpop.f32.mrb[0].mxu0
    %548 = vmatprep.mubr.f32.mxu0 0.0
    %549 = vmatmul.mubr.f32.gmra.mrb[0].mxu0 %v471
    %v550 = vpop.f32.mrb[0].mxu0
    %v551 = vadd.f32 %v475, %v550
    %v552 = vpop.f32.mrb[0].mxu0
    %553 = vdwg.mxu0
    %v554 = vxor.u32 %v546, 2147483648
    %v555 = vxor.u32 %v551, 2147483648
    %v556 = vmul.f32 %v554, 1.442695
    %v557 = vpow.pop %v556
    %v558 = vmul.f32 %v555, 1.442695
    %v559 = vpow.pop %v558
    %v560 = vadd.f32 %v557, 1.0
    %v561 = vadd.f32 %v559, 1.0
    %v562 = vrcp.pop %v560
    %v563 = vmul.f32 1.0, %v562
    %v564 = vrcp.pop %v561
    %v565 = vmul.f32 1.0, %v564
    %vm566 = vcmask 31744
    %567 = vst.msk [vmem:[%s3] sm:$0xff] %vm566, %v563
    %568 = vst.msk [vmem:[%s3 + $0x8] sm:$0xff] %vm566, %v565
    // Predicated region
    $region18: #{tpu_custom_call.1} parent=1 // pred_check
      _
    $region19: #{tpu_custom_call.1} parent=1 // pred_check_branch
      %570 = sbr.rel (0) target = $region21
    $region20: #{tpu_custom_call.1} parent=1 // pred_region
      _
    $region21: #{tpu_custom_call.1} parent=1 // pred_fallthru
      _
    // Predicated region
    $region22: #{tpu_custom_call.1} parent=1 // pred_check
      _
    $region23: #{tpu_custom_call.1} parent=1 // pred_check_branch
      %572 = sbr.rel (0) target = $region25
    $region24: #{tpu_custom_call.1} parent=1 // pred_region
      _
    $region25: #{tpu_custom_call.1} parent=1 // pred_fallthru
      _
    %573 = vsyncpa [#allocation5], 1
    %574 = vsyncpa [#allocation7], 1

</llo_original>
